<compile_context>
chip_gen: v5e
topology: v5e:2x2
jax: 0.10.0
libtpu: 0.0.40
codegen_flags: <defaults>
</compile_context>

<pallas_src>
import jax
import jax.numpy as jnp
import numpy as np
from jax.experimental import pallas as pl
from jax.experimental.pallas import tpu as pltpu

# ---------------- static config (module __init__ args) ----------------
NDOF = 7                  # n_dofs
NDOF_PAD = 8              # MXU contract dim (stray state row hits a zero weight column)
HID = 32                  # hidden width of the synthetic self-collision MLP
D = 3 * NDOF              # state dim: [q, qd, qdd] = 21
B = 2                     # batch
H = 8                     # horizon

D_PAD = 32                # sublane padding of the transposed state (== HID, mult of 8)
N_PAD = 128               # lane padding (full vreg lane width); requires B*H <= 128
NCONST = 8                # lanes of the packed-constants block

DIST_THRESH = -0.01       # distance_threshold
SELFCOLL_W = 500.0        # selfcoll_weight
BOUND_W = 50.0            # bound_weight
STOP_W = 1.0              # stop_weight
BOUND_THRESH = 0.1        # bound_thresh
MAX_NLIMIT = 2.5          # max_nlimit
TRAJ_DT = 0.02            # traj_dt value (constant per step)

assert HID == D_PAD       # consts rows double as b1/w2 (HID) and lb/ub (D_PAD) columns


# ---------------------------- Pallas kernel ----------------------------
def cost_kernel(state_ref, w1t_ref, consts_ref, out_ref):
    state = state_ref[...]              # (D_PAD, N_PAD): sublanes=features, lanes=B*H rows
    w1t = w1t_ref[...]                  # (HID, NDOF_PAD); columns NDOF..NDOF_PAD-1 are 0
    c = consts_ref[...]                 # (HID, NCONST) packed constants

    b1 = c[:, 0:1]                      # (HID, 1)
    w2 = c[:, 1:2]                      # (HID, 1)
    b2 = c[0:1, 2:3]                    # (1, 1)
    lb = c[:, 3:4]                      # (D_PAD, 1)  rows >= D hold -1
    ub = c[:, 4:5]                      # (D_PAD, 1)  rows >= D hold +1

    # --- self-collision cost: res = w2 . relu(W1^T q + b1) + b2   (MXU + VPU) ---
    q = state[:NDOF_PAD, :]             # (NDOF_PAD, N_PAD); row NDOF is qd[0] * zero weight
    hidden = jnp.dot(w1t, q, preferred_element_type=jnp.float32) + b1   # (HID, N_PAD)
    hidden = jnp.maximum(hidden, 0.0)
    res = jnp.sum(hidden * w2, axis=0, keepdims=True) + b2              # (1, N_PAD)
    res = jnp.clip(res + DIST_THRESH, 0.0, 0.5)
    selfcoll_cost = SELFCOLL_W * res    # GaussianProjection({}) == identity

    # --- bound cost (padded rows have lb=-1 < 0 < ub=+1 -> contribute exactly 0) ---
    inside = jnp.logical_and(state < ub, state > lb)
    bc = jnp.minimum(jnp.square(state - lb), jnp.square(ub - state))
    bc = jnp.where(inside, 0.0, bc)
    bound_cost = BOUND_W * jnp.sqrt(jnp.sum(bc, axis=0, keepdims=True))  # (1, N_PAD)

    # --- stop cost: max_vel recomputed in-kernel from the lane (= b*H + h) index ---
    lane = jax.lax.broadcasted_iota(jnp.int32, (1, N_PAD), 1)
    h_idx = jnp.remainder(lane, H)                              # horizon index per lane
    max_vel = (H - h_idx).astype(jnp.float32) * (TRAJ_DT * MAX_NLIMIT)   # (1, N_PAD)
    row = jax.lax.broadcasted_iota(jnp.int32, (D_PAD, 1), 0)
    vel_rows = jnp.logical_and(row >= NDOF, row < 2 * NDOF)     # select qd feature rows
    va = jnp.maximum(jnp.abs(state) - max_vel, 0.0)
    va = jnp.where(vel_rows, va, 0.0)
    stop_cost = STOP_W * jnp.sum(va * va, axis=0, keepdims=True)         # (1, N_PAD)

    out_ref[...] = bound_cost + stop_cost + selfcoll_cost       # lane-dense (1, N_PAD)


# ------------------------------ wrapper --------------------------------
@jax.jit
def robot_cost_pallas(state_batch, w1, b1, w2, b2, lb, ub):
    b, hor, d = state_batch.shape
    n = b * hor
    assert d == D and hor == H
    assert n <= N_PAD and d <= D_PAD
    # TODO(synk): for B*H > 128, tile the lane axis with a grid (>=256-row tiles/core)
    #             instead of padding to a single 128-lane row.

    # transposed, zero-padded state: (D_PAD, N_PAD)
    state_t = jnp.zeros((D_PAD, N_PAD), jnp.float32)
    state_t = state_t.at[:d, :n].set(state_batch.reshape(n, d).astype(jnp.float32).T)

    # W1^T padded on the contract dim.  Columns NDOF..NDOF_PAD-1 MUST stay zero: the
    # MXU RHS rows include the stray qd[0] state row in place of an explicit zero-pad.
    w1t = jnp.zeros((HID, NDOF_PAD), jnp.float32).at[:, :NDOF].set(w1.T)

    # packed constants: col 0 = b1, 1 = w2, 2 = b2 (at [0,2]), 3 = lb, 4 = ub
    consts = jnp.zeros((HID, NCONST), jnp.float32)
    consts = consts.at[:, 0].set(b1)
    consts = consts.at[:, 1].set(w2)
    consts = consts.at[0, 2].set(b2)
    consts = consts.at[:, 3].set(jnp.full((D_PAD,), -1.0, jnp.float32).at[:d].set(lb))
    consts = consts.at[:, 4].set(jnp.full((D_PAD,), 1.0, jnp.float32).at[:d].set(ub))

    out = pl.pallas_call(
        cost_kernel,
        out_shape=jax.ShapeDtypeStruct((1, N_PAD), jnp.float32),
        grid=(1,),
        in_specs=[
            pl.BlockSpec((D_PAD, N_PAD), lambda i: (0, 0)),     # transposed state
            pl.BlockSpec((HID, NDOF_PAD), lambda i: (0, 0)),    # W1^T (MXU LHS)
            pl.BlockSpec((HID, NCONST), lambda i: (0, 0)),      # packed constants
        ],
        out_specs=pl.BlockSpec((1, N_PAD), lambda i: (0, 0)),
        compiler_params=pltpu.CompilerParams(
            dimension_semantics=("arbitrary",)),
        cost_estimate=pl.CostEstimate(
            flops=2 * HID * NDOF_PAD * N_PAD + 16 * D_PAD * N_PAD,
            transcendentals=N_PAD,
            bytes_accessed=4 * (D_PAD * N_PAD + HID * NDOF_PAD + HID * NCONST + N_PAD)),
    )(state_t, w1t, consts)

    return out[0, :n].reshape(b, hor)


# ------------------------- pure-JAX reference -------------------------
def robot_cost_ref(state_batch, max_vel, w1, b1, w2, b2, lb, ub):
    bsz, hor, d = state_batch.shape
    q = state_batch[:, :, :NDOF].reshape(bsz * hor, NDOF)
    hidden = jnp.maximum(q @ w1 + b1, 0.0)
    res = hidden @ w2 + b2                        # (N,)
    res = res.reshape(bsz, hor) + DIST_THRESH
    res = jnp.clip(res, 0.0, 0.5)
    selfcoll_cost = SELFCOLL_W * res

    inside = jnp.logical_and(state_batch < ub, state_batch > lb)
    c = jnp.minimum(jnp.square(state_batch - lb), jnp.square(ub - state_batch))
    c = jnp.where(inside, 0.0, c)
    bound_cost = BOUND_W * jnp.sqrt(jnp.sum(c, axis=-1))

    vels = state_batch[:, :, NDOF:2 * NDOF]
    va = jnp.maximum(jnp.abs(vels) - max_vel, 0.0)       # max_vel (H, 1) broadcast
    stop_cost = STOP_W * jnp.sum(jnp.square(va), axis=-1)

    return bound_cost + stop_cost + selfcoll_cost


# ------------------------------- main ----------------------------------
if __name__ == "__main__":
    key = jax.random.PRNGKey(0)
    k_state, k_w1, k_b1, k_w2, k_b2 = jax.random.split(key, 5)

    # input: state_batch (B, H, D) = (batch, horizon, [q, qd, qdd])
    state_batch = 1.5 * jax.random.normal(k_state, (B, H, D), dtype=jnp.float32)

    # deterministic synthetic self-collision MLP parameters
    w1 = 0.3 * jax.random.normal(k_w1, (NDOF, HID), dtype=jnp.float32)
    b1 = 0.1 * jax.random.normal(k_b1, (HID,), dtype=jnp.float32)
    w2 = 0.3 * jax.random.normal(k_w2, (HID,), dtype=jnp.float32)
    b2 = 0.1 * jax.random.normal(k_b2, (), dtype=jnp.float32)

    # bounds (D, 2) -> shrink by bound_thresh * half-range, as in __init__
    lb_raw = -(1.5 + 0.05 * jnp.arange(D, dtype=jnp.float32))
    ub_raw = +(1.5 + 0.05 * jnp.arange(D, dtype=jnp.float32))
    bnd_range = (ub_raw - lb_raw) / 2.0
    thresh = BOUND_THRESH * bnd_range
    lb = lb_raw + thresh
    ub = ub_raw - thresh

    # max_vel = (triu(ones(H,H)) @ (traj_dt * max_nlimit))[:, None]   (H, 1)
    traj_dt = jnp.full((H,), TRAJ_DT, dtype=jnp.float32)
    sum_matrix = jnp.triu(jnp.ones((H, H), dtype=jnp.float32))   # tril(ones).T
    max_vel = (sum_matrix @ (traj_dt * MAX_NLIMIT))[:, None]

    out = robot_cost_pallas(state_batch, w1, b1, w2, b2, lb, ub)
    out = jax.block_until_ready(out)

    ref = robot_cost_ref(state_batch, max_vel, w1, b1, w2, b2, lb, ub)
    np.testing.assert_allclose(np.asarray(out), np.asarray(ref), rtol=1e-5, atol=1e-5)

    print("KERNEL_OK")
</pallas_src>

<mosaic_0001>
module attributes {stable_mosaic.version = 11 : i64} {
  func.func @cost_kernel(%arg0: i32, %arg1: memref<32x128xf32, #tpu.memory_space<vmem>>, %arg2: memref<32x8xf32, #tpu.memory_space<vmem>>, %arg3: memref<32x8xf32, #tpu.memory_space<vmem>>, %arg4: memref<1x128xf32, #tpu.memory_space<vmem>>) attributes {dimension_semantics = [#tpu.dimension_semantics<arbitrary>], iteration_bounds = array<i64: 1>, scalar_prefetch = 0 : i64, scratch_operands = 0 : i64, tpu.core_type = #tpu.core_type<tc>, window_params = [{pipeline_mode = #tpu.pipeline_mode<synchronous>, transform_indices = @transform_0, window_bounds = array<i64: 32, 128>}, {pipeline_mode = #tpu.pipeline_mode<synchronous>, transform_indices = @transform_1, window_bounds = array<i64: 32, 8>}, {pipeline_mode = #tpu.pipeline_mode<synchronous>, transform_indices = @transform_2, window_bounds = array<i64: 32, 8>}, {pipeline_mode = #tpu.pipeline_mode<synchronous>, transform_indices = @transform_3, window_bounds = array<i64: 1, 128>}]} {
    %c0 = arith.constant 0 : index
    %c0_0 = arith.constant 0 : index
    %0 = vector.load %arg1[%c0, %c0_0] : memref<32x128xf32, #tpu.memory_space<vmem>>, vector<32x128xf32>
    %c0_1 = arith.constant 0 : index
    %c0_2 = arith.constant 0 : index
    %1 = vector.load %arg2[%c0_1, %c0_2] : memref<32x8xf32, #tpu.memory_space<vmem>>, vector<32x8xf32>
    %c0_3 = arith.constant 0 : index
    %c0_4 = arith.constant 0 : index
    %2 = vector.load %arg3[%c0_3, %c0_4] : memref<32x8xf32, #tpu.memory_space<vmem>>, vector<32x8xf32>
    %3 = vector.extract_strided_slice %2 {offsets = [0, 0], sizes = [32, 1], strides = [1, 1]} : vector<32x8xf32> to vector<32x1xf32>
    %4 = vector.extract_strided_slice %2 {offsets = [0, 1], sizes = [32, 1], strides = [1, 1]} : vector<32x8xf32> to vector<32x1xf32>
    %5 = vector.extract_strided_slice %2 {offsets = [0, 2], sizes = [1, 1], strides = [1, 1]} : vector<32x8xf32> to vector<1x1xf32>
    %6 = vector.extract_strided_slice %2 {offsets = [0, 3], sizes = [32, 1], strides = [1, 1]} : vector<32x8xf32> to vector<32x1xf32>
    %7 = vector.extract_strided_slice %2 {offsets = [0, 4], sizes = [32, 1], strides = [1, 1]} : vector<32x8xf32> to vector<32x1xf32>
    %8 = vector.extract_strided_slice %0 {offsets = [0, 0], sizes = [8, 128], strides = [1, 1]} : vector<32x128xf32> to vector<8x128xf32>
    %cst = arith.constant dense<0.000000e+00> : vector<32x128xf32>
    %9 = tpu.matmul %1, %8, %cst {dimension_numbers = #tpu.dot_dimension_numbers<[1], [0], [0], [1], [0, 0, 1, 1], [], []>} : vector<32x8xf32>, vector<8x128xf32>, vector<32x128xf32> -> vector<32x128xf32>
    %10 = vector.broadcast %3 : vector<32x1xf32> to vector<32x128xf32>
    %11 = arith.addf %9, %10 : vector<32x128xf32>
    %cst_5 = arith.constant 0.000000e+00 : f32
    %12 = vector.broadcast %cst_5 : f32 to vector<32x128xf32>
    %13 = arith.maximumf %11, %12 : vector<32x128xf32>
    %14 = vector.broadcast %4 : vector<32x1xf32> to vector<32x128xf32>
    %15 = arith.mulf %13, %14 : vector<32x128xf32>
    %cst_6 = arith.constant dense<0.000000e+00> : vector<128xf32>
    %16 = vector.multi_reduction <add>, %15, %cst_6 [0] : vector<32x128xf32> to vector<128xf32>
    %17 = vector.shape_cast %16 : vector<128xf32> to vector<1x128xf32>
    %18 = vector.broadcast %5 : vector<1x1xf32> to vector<1x128xf32>
    %19 = arith.addf %17, %18 : vector<1x128xf32>
    %cst_7 = arith.constant -0.00999999977 : f32
    %20 = vector.broadcast %cst_7 : f32 to vector<1x128xf32>
    %21 = arith.addf %19, %20 : vector<1x128xf32>
    %cst_8 = arith.constant 0.000000e+00 : f32
    %cst_9 = arith.constant 5.000000e-01 : f32
    %22 = vector.broadcast %cst_8 : f32 to vector<1x128xf32>
    %23 = arith.maximumf %22, %21 : vector<1x128xf32>
    %24 = vector.broadcast %cst_9 : f32 to vector<1x128xf32>
    %25 = arith.minimumf %24, %23 : vector<1x128xf32>
    %cst_10 = arith.constant 5.000000e+02 : f32
    %26 = vector.broadcast %cst_10 : f32 to vector<1x128xf32>
    %27 = arith.mulf %26, %25 : vector<1x128xf32>
    %28 = vector.broadcast %7 : vector<32x1xf32> to vector<32x128xf32>
    %29 = arith.cmpf olt, %0, %28 : vector<32x128xf32>
    %30 = vector.broadcast %6 : vector<32x1xf32> to vector<32x128xf32>
    %31 = arith.cmpf ogt, %0, %30 : vector<32x128xf32>
    %32 = arith.andi %29, %31 : vector<32x128xi1>
    %33 = vector.broadcast %6 : vector<32x1xf32> to vector<32x128xf32>
    %34 = arith.subf %0, %33 : vector<32x128xf32>
    %35 = arith.mulf %34, %34 : vector<32x128xf32>
    %36 = vector.broadcast %7 : vector<32x1xf32> to vector<32x128xf32>
    %37 = arith.subf %36, %0 : vector<32x128xf32>
    %38 = arith.mulf %37, %37 : vector<32x128xf32>
    %39 = arith.minimumf %35, %38 : vector<32x128xf32>
    %cst_11 = arith.constant 0.000000e+00 : f32
    %40 = vector.broadcast %cst_11 : f32 to vector<32x128xf32>
    %41 = arith.select %32, %40, %39 : vector<32x128xi1>, vector<32x128xf32>
    %cst_12 = arith.constant dense<0.000000e+00> : vector<128xf32>
    %42 = vector.multi_reduction <add>, %41, %cst_12 [0] : vector<32x128xf32> to vector<128xf32>
    %43 = vector.shape_cast %42 : vector<128xf32> to vector<1x128xf32>
    %44 = math.sqrt %43 : vector<1x128xf32>
    %cst_13 = arith.constant 5.000000e+01 : f32
    %45 = vector.broadcast %cst_13 : f32 to vector<1x128xf32>
    %46 = arith.mulf %45, %44 : vector<1x128xf32>
    %47 = tpu.iota {dimensions = array<i32: 1>} : vector<1x128xi32>
    %c8_i32 = arith.constant 8 : i32
    %c0_i32 = arith.constant 0 : i32
    %48 = arith.cmpi eq, %c8_i32, %c0_i32 : i32
    %c1_i32 = arith.constant 1 : i32
    %49 = arith.select %48, %c1_i32, %c8_i32 : i32
    %50 = vector.broadcast %49 : i32 to vector<1x128xi32>
    %51 = arith.remsi %47, %50 : vector<1x128xi32>
    %c0_i32_14 = arith.constant 0 : i32
    %52 = vector.broadcast %c0_i32_14 : i32 to vector<1x128xi32>
    %53 = arith.cmpi ne, %51, %52 : vector<1x128xi32>
    %c0_i32_15 = arith.constant 0 : i32
    %54 = vector.broadcast %c0_i32_15 : i32 to vector<1x128xi32>
    %55 = arith.cmpi slt, %51, %54 : vector<1x128xi32>
    %c0_i32_16 = arith.constant 0 : i32
    %56 = arith.cmpi slt, %49, %c0_i32_16 : i32
    %57 = vector.broadcast %56 : i1 to vector<1x128xi1>
    %58 = vector.broadcast %57 : vector<1x128xi1> to vector<1x128xi1>
    %59 = arith.xori %55, %58 : vector<1x128xi1>
    %60 = arith.andi %59, %53 : vector<1x128xi1>
    %61 = vector.broadcast %49 : i32 to vector<1x128xi32>
    %62 = arith.addi %51, %61 : vector<1x128xi32>
    %63 = arith.select %60, %62, %51 : vector<1x128xi1>, vector<1x128xi32>
    %c8_i32_17 = arith.constant 8 : i32
    %64 = vector.broadcast %c8_i32_17 : i32 to vector<1x128xi32>
    %65 = arith.subi %64, %63 : vector<1x128xi32>
    %66 = arith.sitofp %65 : vector<1x128xi32> to vector<1x128xf32>
    %cst_18 = arith.constant 5.000000e-02 : f32
    %67 = vector.broadcast %cst_18 : f32 to vector<1x128xf32>
    %68 = arith.mulf %66, %67 : vector<1x128xf32>
    %69 = tpu.iota {dimensions = array<i32: 0>} : vector<32x1xi32>
    %c7_i32 = arith.constant 7 : i32
    %70 = vector.broadcast %c7_i32 : i32 to vector<32x1xi32>
    %71 = arith.cmpi sge, %69, %70 : vector<32x1xi32>
    %c14_i32 = arith.constant 14 : i32
    %72 = vector.broadcast %c14_i32 : i32 to vector<32x1xi32>
    %73 = arith.cmpi slt, %69, %72 : vector<32x1xi32>
    %74 = arith.andi %71, %73 : vector<32x1xi1>
    %75 = math.absf %0 : vector<32x128xf32>
    %76 = vector.broadcast %68 : vector<1x128xf32> to vector<32x128xf32>
    %77 = arith.subf %75, %76 : vector<32x128xf32>
    %cst_19 = arith.constant 0.000000e+00 : f32
    %78 = vector.broadcast %cst_19 : f32 to vector<32x128xf32>
    %79 = arith.maximumf %77, %78 : vector<32x128xf32>
    %cst_20 = arith.constant 0.000000e+00 : f32
    %80 = vector.shape_cast %74 : vector<32x1xi1> to vector<32x1xi1>
    %81 = vector.broadcast %80 : vector<32x1xi1> to vector<32x128xi1>
    %82 = vector.broadcast %cst_20 : f32 to vector<32x128xf32>
    %83 = arith.select %81, %79, %82 : vector<32x128xi1>, vector<32x128xf32>
    %84 = arith.mulf %83, %83 : vector<32x128xf32>
    %cst_21 = arith.constant dense<0.000000e+00> : vector<128xf32>
    %85 = vector.multi_reduction <add>, %84, %cst_21 [0] : vector<32x128xf32> to vector<128xf32>
    %86 = vector.shape_cast %85 : vector<128xf32> to vector<1x128xf32>
    %cst_22 = arith.constant 1.000000e+00 : f32
    %87 = vector.broadcast %cst_22 : f32 to vector<1x128xf32>
    %88 = arith.mulf %87, %86 : vector<1x128xf32>
    %89 = arith.addf %46, %88 : vector<1x128xf32>
    %90 = arith.addf %89, %27 : vector<1x128xf32>
    %c0_23 = arith.constant 0 : index
    %c0_24 = arith.constant 0 : index
    %91 = vector.load %arg4[%c0_23, %c0_24] : memref<1x128xf32, #tpu.memory_space<vmem>>, vector<1x128xf32>
    tpu.vector_store %arg4[%c0_23, %c0_24], %90 {strides = array<i32>} : memref<1x128xf32, #tpu.memory_space<vmem>>, vector<1x128xf32>,
    return
  }
  func.func @transform_0(%arg0: i32) -> (i32, i32) {
    %c0_i32 = arith.constant 0 : i32
    %c0_i32_0 = arith.constant 0 : i32
    %c0_i32_1 = arith.constant 0 : i32
    return %c0_i32, %c0_i32_0 : i32, i32
  }
  func.func @transform_1(%arg0: i32) -> (i32, i32) {
    %c0_i32 = arith.constant 0 : i32
    %c0_i32_0 = arith.constant 0 : i32
    %c0_i32_1 = arith.constant 0 : i32
    return %c0_i32, %c0_i32_0 : i32, i32
  }
  func.func @transform_2(%arg0: i32) -> (i32, i32) {
    %c0_i32 = arith.constant 0 : i32
    %c0_i32_0 = arith.constant 0 : i32
    %c0_i32_1 = arith.constant 0 : i32
    return %c0_i32, %c0_i32_0 : i32, i32
  }
  func.func @transform_3(%arg0: i32) -> (i32, i32) {
    %c0_i32 = arith.constant 0 : i32
    %c0_i32_0 = arith.constant 0 : i32
    %c0_i32_1 = arith.constant 0 : i32
    return %c0_i32, %c0_i32_0 : i32, i32
  }
}

</mosaic_0001>

<llo_original>
// kernel: squeeze.1
$region0: #{squeeze.1}
  %s0 = inlined_call_operand.vmem [shape: f32[16], index: 0, kind: input, shape index: {}]
  %s1 = inlined_call_operand.hbm [shape: f32[2,8], index: 1, kind: output, shape index: {}]
  $region1: #{squeeze.1} parent=0
    #allocation0 [shape = 'u8[1024]{0}', space=vmem, size = 0x400, scoped, tag = 'operand span for operand 1']
    #allocation1 [shape = 's32[1]{0}', space=sflag, size = 0x4, scoped, tag = 'scoped memory for squeeze.1']
    #allocation2 [shape = 'u8[4096]{0}', space=vmem, size = 0x1000, scoped, tag = 'scoped mem for output reshape']
    #allocation3 [shape = 'u8[4096]{0}', space=vmem, size = 0x1000, scoped, tag = 'scoped mem for input reshape']
    %2 = vsyncpa [#allocation1], 0
    %s4 = ssub.s32 2, 1
    %v5 = vld [vmem:[%s0] sm:%s4]
    %6 = vst [vmem:[#allocation3] sm:%s4] %v5
    %v7 = vld [vmem:[#allocation3] sm:$0x1]
    %vm8 = vcmask 64512
    %9 = vst.msk [vmem:[#allocation2] sm:$0x1] %vm8, %v7
    %v10 = vld [vmem:[#allocation3] sm:$0x1]
    %11 = vrot.lane.b32.xlu0 %v10, 120
    %v12 = vpop.permute.xlu0 %11
    %vm13 = vcmask 64512
    %s14 = scalar_lea.vmem [#allocation2], 1
    %15 = vst.msk [vmem:[%s14] sm:$0x1] %vm13, %v12
    %s17 = ssub.s32 4, 1
    %v18 = vld [vmem:[#allocation2] sm:%s17]
    %s20 = ssub.s32 4, 1
    %21 = vst [vmem:[#allocation0] sm:%s20] %v18
    %23 = vsyncadd [#allocation1], 0
    %s25 = sshll.u32 [#allocation0], 4
    %s26 = int_to_ptr.vmem [resolvable:$true] %s25
    %s27 = sshll.u32 %s1, 4
    %s28 = int_to_ptr.hbm [resolvable:$true] %s27
    %30 = dma.vmem_to_hbm [thread:$0]  %s26, 32, %s28, [#allocation1]
    %32 = dma.done [#allocation1], 32
    %33 = vsyncpa [#allocation1], 1

// kernel: robot_cost_pallas.1
$region0: #{robot_cost_pallas.1}
  #allocation0 [shape = 'u32[]', space=smem, size = 0x4, offset = 0x4, fixed_abs, tag = 'smem constant byte address 0x4 - core index']
  #allocation1 [shape = 'u32[72,128]{1,0:T(1,128)}', space=vmem, size = 0x9000, scoped, tag = 'internal scratch']
  %s0 = inlined_call_operand.vmem [shape: f32[32,128], index: 0, kind: input, shape index: {}]
  %s1 = inlined_call_operand.vmem [shape: f32[32,8], index: 1, kind: input, shape index: {}]
  %s2 = inlined_call_operand.vmem [shape: f32[32,8], index: 2, kind: input, shape index: {}]
  %s3 = inlined_call_operand.vmem [shape: f32[1,128], index: 3, kind: output, shape index: {}]
  %s4 = sld [smem:[#allocation0]]
  $region22: #{robot_cost_pallas.1} parent=0
    _
  %s6 = ssub.s32 1, %s4
  %s7 = scalar_select 0, %s6, %s4
  // Predicated region
  $region2: #{robot_cost_pallas.1} parent=0 // pred_check
    _
  $region3: #{robot_cost_pallas.1} parent=0 // pred_check_branch
    %9 = sbr.rel (0) target = $region5
  $region4: #{robot_cost_pallas.1} parent=0 // pred_region
    _
  $region5: #{robot_cost_pallas.1} parent=0 // pred_fallthru
    _
  // Predicated region
  $region6: #{robot_cost_pallas.1} parent=0 // pred_check
    _
  $region7: #{robot_cost_pallas.1} parent=0 // pred_check_branch
    %11 = sbr.rel (0) target = $region9
  $region8: #{robot_cost_pallas.1} parent=0 // pred_region
    _
  $region9: #{robot_cost_pallas.1} parent=0 // pred_fallthru
    _
  // Predicated region
  $region10: #{robot_cost_pallas.1} parent=0 // pred_check
    _
  $region11: #{robot_cost_pallas.1} parent=0 // pred_check_branch
    %13 = sbr.rel (0) target = $region13
  $region12: #{robot_cost_pallas.1} parent=0 // pred_region
    _
  $region13: #{robot_cost_pallas.1} parent=0 // pred_fallthru
    _
  %v14 = vld [vmem:[%s0] sm:$0xff]
  %v15 = vld [vmem:[%s0 + $0x8] sm:$0xff]
  %v16 = vld [vmem:[%s0 + $0x10] sm:$0xff]
  %v17 = vld [vmem:[%s0 + $0x18] sm:$0xff]
  %v18 = vld [vmem:[%s1] sm:$0xff]
  %v19 = vld [vmem:[%s1 + $0x8] sm:$0xff]
  %v20 = vld [vmem:[%s1 + $0x10] sm:$0xff]
  %v21 = vld [vmem:[%s1 + $0x18] sm:$0xff]
  %v22 = vld [vmem:[%s2] sm:$0xff]
  %v23 = vld [vmem:[%s2 + $0x8] sm:$0xff]
  %v24 = vld [vmem:[%s2 + $0x10] sm:$0xff]
  %v25 = vld [vmem:[%s2 + $0x18] sm:$0xff]
  %27 = vset.pattern.permute.xlu0 0
  %28 = vperm.xlu0 %27, %v22
  %v29 = vpop.permute.xlu0 %28
  %32 = vset.pattern.permute.xlu0 0
  %33 = vperm.xlu0 %32, %v23
  %v34 = vpop.permute.xlu0 %33
  %37 = vset.pattern.permute.xlu0 0
  %38 = vperm.xlu0 %37, %v24
  %v39 = vpop.permute.xlu0 %38
  %42 = vset.pattern.permute.xlu0 0
  %43 = vperm.xlu0 %42, %v25
  %v44 = vpop.permute.xlu0 %43
  %vm46 = vcmask 64512
  %v48 = vsel %vm46, %v18, 0
  %v51 = vsel %vm46, %v19, 0
  %v54 = vsel %vm46, %v20, 0
  %v57 = vsel %vm46, %v21, 0
  %59 = vmatpush.msra.mxu0 0.0
  %60 = vmatpush.msra.mxu0 0.0
  %61 = vmatpush.msra.mxu0 0.0
  %62 = vmatpush.msra.mxu0 0.0
  %63 = vmatpush.msra.mxu0 0.0
  %64 = vmatpush.msra.mxu0 0.0
  %65 = vmatpush.msra.mxu0 0.0
  %66 = vmatpush.msra.mxu0 0.0
  %67 = vmatpush.msra.mxu0 0.0
  %68 = vmatpush.msra.mxu0 0.0
  %69 = vmatpush.msra.mxu0 0.0
  %70 = vmatpush.msra.mxu0 0.0
  %71 = vmatpush.msra.mxu0 0.0
  %72 = vmatpush.msra.mxu0 0.0
  %73 = vmatpush.msra.mxu0 0.0
  %74 = vmatpush.msra.mxu0 %v14
  %75 = vmatmul.f32.gmra.mxu0 %v48
  %v76 = vpop.f32.mrf.mxu0
  %v77 = vadd.f32 %v29, %v76
  %78 = vmatmul.f32.gmra.mxu0 %v51
  %v79 = vpop.f32.mrf.mxu0
  %v80 = vadd.f32 %v34, %v79
  %81 = vmatmul.f32.gmra.mxu0 %v54
  %v82 = vpop.f32.mrf.mxu0
  %v83 = vadd.f32 %v39, %v82
  %84 = vmatmul.f32.gmra.mxu0 %v57
  %v85 = vpop.f32.mrf.mxu0
  %v86 = vadd.f32 %v44, %v85
  %87 = vdwg.mxu0
  %v88 = vmax.f32 %v77, 0.0
  %v89 = vmax.f32 %v80, 0.0
  %v90 = vmax.f32 %v83, 0.0
  %v91 = vmax.f32 %v86, 0.0
  %92 = vset.pattern.permute.xlu0 1
  %93 = vperm.xlu0 %92, %v22
  %v94 = vpop.permute.xlu0 %93
  %96 = vset.pattern.permute.xlu0 1
  %97 = vperm.xlu0 %96, %v23
  %v98 = vpop.permute.xlu0 %97
  %100 = vset.pattern.permute.xlu0 1
  %101 = vperm.xlu0 %100, %v24
  %v102 = vpop.permute.xlu0 %101
  %104 = vset.pattern.permute.xlu0 1
  %105 = vperm.xlu0 %104, %v25
  %v106 = vpop.permute.xlu0 %105
  %v108 = vmul.f32 %v88, %v94
  %v109 = vmul.f32 %v89, %v98
  %v110 = vmul.f32 %v90, %v102
  %v111 = vmul.f32 %v91, %v106
  %v112 = vadd.f32 %v108, %v109
  %v113 = vadd.f32 %v112, %v110
  %v114 = vadd.f32 %v113, %v111
  %v115 = vrot.slane %v114, 4
  %v116 = vadd.f32 %v114, %v115
  %v117 = vrot.slane %v116, 2
  %v118 = vadd.f32 %v116, %v117
  %v119 = vrot.slane %v118, 1
  %v120 = vadd.f32 %v118, %v119
  %121 = vset.pattern.permute.xlu0 2
  %122 = vperm.xlu0 %121, %v22
  %v123 = vpop.permute.xlu0 %122
  %v125 = vadd.f32 %v120, %v123
  %v126 = vadd.f32 %v125, -0.01
  %v127 = vmax.f32 %v126, 0.0
  %v128 = vmin.f32 %v127, 0.5
  %v129 = vmul.f32 %v128, 500.0
  %130 = vset.pattern.permute.xlu0 4
  %131 = vperm.xlu0 %130, %v22
  %v132 = vpop.permute.xlu0 %131
  %134 = vset.pattern.permute.xlu0 4
  %135 = vperm.xlu0 %134, %v23
  %v136 = vpop.permute.xlu0 %135
  %138 = vset.pattern.permute.xlu0 4
  %139 = vperm.xlu0 %138, %v24
  %v140 = vpop.permute.xlu0 %139
  %142 = vset.pattern.permute.xlu0 4
  %143 = vperm.xlu0 %142, %v25
  %v144 = vpop.permute.xlu0 %143
  %vm146 = vcmp.lt.f32.partialorder %v14, %v132
  %vm147 = vcmp.lt.f32.partialorder %v15, %v136
  %vm148 = vcmp.lt.f32.partialorder %v16, %v140
  %vm149 = vcmp.lt.f32.partialorder %v17, %v144
  %150 = vset.pattern.permute.xlu0 3
  %151 = vperm.xlu0 %150, %v22
  %v152 = vpop.permute.xlu0 %151
  %154 = vset.pattern.permute.xlu0 3
  %155 = vperm.xlu0 %154, %v23
  %v156 = vpop.permute.xlu0 %155
  %158 = vset.pattern.permute.xlu0 3
  %159 = vperm.xlu0 %158, %v24
  %v160 = vpop.permute.xlu0 %159
  %162 = vset.pattern.permute.xlu0 3
  %163 = vperm.xlu0 %162, %v25
  %v164 = vpop.permute.xlu0 %163
  %vm166 = vcmp.gt.f32.partialorder %v14, %v152
  %vm167 = vcmp.gt.f32.partialorder %v15, %v156
  %vm168 = vcmp.gt.f32.partialorder %v16, %v160
  %vm169 = vcmp.gt.f32.partialorder %v17, %v164
  %vm170 = vmand %vm146, %vm166
  %vm171 = vmand %vm147, %vm167
  %vm172 = vmand %vm148, %vm168
  %vm173 = vmand %vm149, %vm169
  %v174 = vsub.f32 %v14, %v152
  %v175 = vsub.f32 %v15, %v156
  %v176 = vsub.f32 %v16, %v160
  %v177 = vsub.f32 %v17, %v164
  %v178 = vmul.f32 %v174, %v174
  %v179 = vmul.f32 %v175, %v175
  %v180 = vmul.f32 %v176, %v176
  %v181 = vmul.f32 %v177, %v177
  %v182 = vsub.f32 %v132, %v14
  %v183 = vsub.f32 %v136, %v15
  %v184 = vsub.f32 %v140, %v16
  %v185 = vsub.f32 %v144, %v17
  %v186 = vmul.f32 %v182, %v182
  %v187 = vmul.f32 %v183, %v183
  %v188 = vmul.f32 %v184, %v184
  %v189 = vmul.f32 %v185, %v185
  %v190 = vmin.f32 %v178, %v186
  %v191 = vmin.f32 %v179, %v187
  %v192 = vmin.f32 %v180, %v188
  %v193 = vmin.f32 %v181, %v189
  %v194 = vsel %vm170, 0.0, %v190
  %v195 = vsel %vm171, 0.0, %v191
  %v196 = vsel %vm172, 0.0, %v192
  %v197 = vsel %vm173, 0.0, %v193
  %v198 = vadd.f32 %v194, %v195
  %v199 = vadd.f32 %v198, %v196
  %v200 = vadd.f32 %v199, %v197
  %v201 = vrot.slane %v200, 4
  %v202 = vadd.f32 %v200, %v201
  %v203 = vrot.slane %v202, 2
  %v204 = vadd.f32 %v202, %v203
  %v205 = vrot.slane %v204, 1
  %v206 = vadd.f32 %v204, %v205
  %v207 = vrsqrt.pop %v206
  %v208 = vmul.f32 %v207, %v206
  %v209 = vmul.f32 %v208, %v207
  %v210 = vmul.f32 0.5, %v209
  %v211 = vsub.f32 1.5, %v210
  %v212 = vmul.f32 %v207, %v211
  %v213 = vmul.f32 %v206, %v212
  %vm214 = vcmp.eq.f32.partialorder %v206, inf
  %v215 = vsel %vm214, %v206, %v213
  %vm216 = vcmp.eq.f32.partialorder %v206, 0.0
  %v217 = vand.u32 %v206, 2147483648
  %v218 = vsel %vm216, %v217, %v215
  %v219 = vmul.f32 %v218, 50.0
  %v220 = vlaneseq
  %v221 = vand.u32 %v220, 127
  %vm222 = vcmp.lt.s32.totalorder %v221, 0
  %v223 = vsub.s32 0, %v221
  %v224 = vsel %vm222, %v223, %v221
  %v225 = vshrl.u32 %v224, 3
  %v226 = vand.u32 %v224, 7
  %v227 = vsub.s32 0, %v226
  %v228 = vsel %vm222, %v227, %v226
  %vm229 = vcmp.ne.s32.totalorder %v228, 0
  %vm230 = vcmp.lt.s32.totalorder %v228, 0
  %vm231 = vmand %vm230, %vm229
  %v232 = vadd.s32 %v228, 8
  %v233 = vsel %vm231, %v232, %v228
  %v234 = vsub.s32 8, %v233
  %v235 = vcvt.s32.f32 %v234
  %v236 = vmul.f32 %v235, 0.05
  %v237 = vlaneseq
  %v238 = vshrl.u32 %v237, 7
  %v239 = vadd.s32 %v238, 8
  %v240 = vadd.s32 %v238, 16
  %v241 = vadd.s32 %v238, 24
  %vm242 = vcmp.ge.s32.totalorder %v238, 7
  %vm243 = vcmp.ge.s32.totalorder %v239, 7
  %vm244 = vcmp.ge.s32.totalorder %v240, 7
  %vm245 = vcmp.ge.s32.totalorder %v241, 7
  %vm246 = vcmp.lt.s32.totalorder %v238, 14
  %vm247 = vcmp.lt.s32.totalorder %v239, 14
  %vm248 = vcmp.lt.s32.totalorder %v240, 14
  %vm249 = vcmp.lt.s32.totalorder %v241, 14
  %vm250 = vmand %vm242, %vm246
  %vm251 = vmand %vm243, %vm247
  %vm252 = vmand %vm244, %vm248
  %vm253 = vmand %vm245, %vm249
  %v254 = vand.u32 2147483647, %v14
  %v255 = vand.u32 2147483647, %v15
  %v256 = vand.u32 2147483647, %v16
  %v257 = vand.u32 2147483647, %v17
  %v258 = vsub.f32 %v254, %v236
  %v259 = vsub.f32 %v255, %v236
  %v260 = vsub.f32 %v256, %v236
  %v261 = vsub.f32 %v257, %v236
  %v262 = vmax.f32 %v258, 0.0
  %v263 = vmax.f32 %v259, 0.0
  %v264 = vmax.f32 %v260, 0.0
  %v265 = vmax.f32 %v261, 0.0
  %v266 = vsel %vm250, 1, 0
  %v267 = vsel %vm251, 1, 0
  %v268 = vsel %vm252, 1, 0
  %v269 = vsel %vm253, 1, 0
  %vm270 = vcmp.eq.s32.totalorder %v266, 1
  %vm271 = vcmp.eq.s32.totalorder %v267, 1
  %vm272 = vcmp.eq.s32.totalorder %v268, 1
  %vm273 = vcmp.eq.s32.totalorder %v269, 1
  %v274 = vsel %vm270, %v262, 0.0
  %v275 = vsel %vm271, %v263, 0.0
  %v276 = vsel %vm272, %v264, 0.0
  %v277 = vsel %vm273, %v265, 0.0
  %v278 = vmul.f32 %v274, %v274
  %v279 = vmul.f32 %v275, %v275
  %v280 = vmul.f32 %v276, %v276
  %v281 = vmul.f32 %v277, %v277
  %v282 = vadd.f32 %v278, %v279
  %v283 = vadd.f32 %v282, %v280
  %v284 = vadd.f32 %v283, %v281
  %v285 = vrot.slane %v284, 4
  %v286 = vadd.f32 %v284, %v285
  %v287 = vrot.slane %v286, 2
  %v288 = vadd.f32 %v286, %v287
  %v289 = vrot.slane %v288, 1
  %v290 = vadd.f32 %v288, %v289
  %v291 = vadd.f32 %v219, %v290
  %v292 = vadd.f32 %v291, %v129
  %293 = vst [vmem:[%s3] sm:$0x1] %v292
  // Predicated region
  $region14: #{robot_cost_pallas.1} parent=0 // pred_check
    _
  $region15: #{robot_cost_pallas.1} parent=0 // pred_check_branch
    %295 = sbr.rel (0) target = $region17
  $region16: #{robot_cost_pallas.1} parent=0 // pred_region
    _
  $region17: #{robot_cost_pallas.1} parent=0 // pred_fallthru
    _
  // Predicated region
  $region18: #{robot_cost_pallas.1} parent=0 // pred_check
    _
  $region19: #{robot_cost_pallas.1} parent=0 // pred_check_branch
    %297 = sbr.rel (0) target = $region21
  $region20: #{robot_cost_pallas.1} parent=0 // pred_region
    _
  $region21: #{robot_cost_pallas.1} parent=0 // pred_fallthru
    _

</llo_original>
